<compile_context>
chip_gen: v7x
topology: tpu7x:2x2x1
jax: 0.10.0
libtpu: 0.0.40
codegen_flags: <defaults>
</compile_context>

<pallas_src>
import functools

import jax
import jax.numpy as jnp
from jax.experimental import pallas as pl
from jax.experimental.pallas import tpu as pltpu

_OUT_LANES = 128                      # lane-dense padding of the 6-wide head output
_VMEM_CAP = 48 * 1024 * 1024          # stay well under v7x's 64 MiB physical VMEM
_TARGET_TILE = 16 * 1024 * 1024       # hidden-state bytes streamed per grid step


def _pool_fc_kernel(h_ref, m_ref, w_ref, b_ref, o_ref, acc_ref, msum_ref, *, seq_tail):
    """One (batch-block, seq-block) grid step of the fused mean-pool + fc head.

    h_ref:   (bB, bS, H)    streamed last-hidden-states tile
    m_ref:   (bB, 1, bS)    attention-mask tile (hidden dtype)
    w_ref:   (H, 128)       fc weight, transposed + lane-padded (f32)
    b_ref:   (1, 128)       fc bias, lane-padded (f32)
    o_ref:   (bB, 1, 128)   lane-padded logits (written on the last seq step)
    acc_ref: (bB, 1, H) f32 running sum(mask * h)
    msum_ref:(bB, 1, 1) f32 running sum(mask)
    seq_tail: static int, number of valid tokens in the last (ragged) seq block; 0 if none.
    """
    s = pl.program_id(1)
    last = pl.num_programs(1) - 1

    @pl.when(s == 0)
    def _init():
        acc_ref[...] = jnp.zeros_like(acc_ref)
        msum_ref[...] = jnp.zeros_like(msum_ref)

    def _accumulate(h, m):
        # Masked sequence reduction on the MXU: (bB,1,bS) @ (bB,bS,H) -> (bB,1,H),
        # f32 accumulation (bf16 inputs stay bf16 on the MXU).
        acc_ref[...] += jnp.einsum("bqs,bsh->bqh", m, h,
                                   preferred_element_type=jnp.float32)
        msum_ref[...] += jnp.sum(m.astype(jnp.float32), axis=2, keepdims=True)

    if seq_tail:  # static Python branch: S % block_s != 0 -> last seq block is ragged
        @pl.when(s != last)
        def _full_block():
            _accumulate(h_ref[...], m_ref[...])

        @pl.when(s == last)
        def _tail_block():
            # Static slices: only the in-bounds tokens are ever read, so out-of-bounds
            # garbage (potentially NaN/Inf) cannot leak into the contraction.
            _accumulate(h_ref[:, :seq_tail, :], m_ref[:, :, :seq_tail])
    else:
        _accumulate(h_ref[...], m_ref[...])

    @pl.when(s == last)
    def _finalize():
        bias = b_ref[...]                                     # (1, 128)
        for b in range(acc_ref.shape[0]):                     # small static unroll
            denom = jnp.maximum(msum_ref[b], 1e-9)            # (1, 1)
            mean_row = acc_ref[b] / denom                     # (1, H), exact division
            logits = jnp.dot(mean_row, w_ref[...],
                             preferred_element_type=jnp.float32)   # (1, 128)
            o_ref[b] = (logits + bias).astype(o_ref.dtype)


def _estimate_vmem_bytes(block_b, block_s, H, itemsize):
    """Rough VMEM footprint (double-buffered inputs/outputs + scratch + temporaries)."""
    pad8 = 8  # a size-1 second-minor dim is padded to 8 sublanes
    hidden = 2 * block_b * block_s * H * itemsize
    mask = 2 * block_b * pad8 * block_s * itemsize
    weight = 2 * H * _OUT_LANES * 4
    bias = 2 * pad8 * _OUT_LANES * 4
    out = 2 * block_b * pad8 * _OUT_LANES * 4
    scratch = block_b * pad8 * H * 4 + block_b * pad8 * _OUT_LANES * 4
    temps = 2 * block_b * pad8 * H * 4                        # einsum partial etc.
    return hidden + mask + weight + bias + out + scratch + temps


def _choose_blocks(B, S, H, itemsize):
    """Pick (block_b, block_s).  Batch axis is never a minor dim of any operand, so it is
    unconstrained; the seq block must be a multiple of 128 (mask lane dim) or equal S."""
    if B <= 8:
        block_b = B
    else:
        # Multiple of 8, <= 32, and at least two batch blocks so v7x's two TensorCores
        # both get work (no effect on single-TC v5e/v6e).
        block_b = min(32, max(8, ((B // 2) // 8) * 8))

    per_token = max(1, block_b * H * itemsize)
    bs = _TARGET_TILE // per_token
    if bs >= S:
        block_s = S
    else:
        block_s = max(128, (min(bs, S) // 128) * 128)

    # Shrink if the total would exceed the VMEM cap (huge-H corner cases).
    while _estimate_vmem_bytes(block_b, block_s, H, itemsize) > _VMEM_CAP:
        if block_s > 128:
            block_s = max(128, ((block_s // 2) // 128) * 128)
        elif block_b > 1:
            block_b = max(1, block_b // 2)
        else:
            break
    return block_b, block_s


def custom_model_forward(last_hidden_states, attention_mask, fc_weight, fc_bias,
                         block_override=None):
    """last_hidden_states: (B, S, H); attention_mask: (B, S);
    fc_weight: (n_out, H) (PyTorch layout); fc_bias: (n_out,) -> (B, n_out) f32."""
    B, S, H = last_hidden_states.shape
    n_out = fc_weight.shape[0]
    dtype = last_hidden_states.dtype

    if block_override is None:
        block_b, block_s = _choose_blocks(B, S, H, dtype.itemsize)
    else:
        block_b, block_s = block_override

    grid = (pl.cdiv(B, block_b), pl.cdiv(S, block_s))
    seq_tail = S % block_s  # valid tokens in the ragged last seq block (0 if it divides)

    # Mask as (B, 1, S) in the hidden dtype so the contraction runs natively on the MXU.
    mask3 = attention_mask.astype(dtype).reshape(B, 1, S)

    # Lane-pad the head: weight (n_out, H) -> (H, 128); bias (n_out,) -> (1, 128).
    w_t = jnp.zeros((H, _OUT_LANES), jnp.float32).at[:, :n_out].set(
        fc_weight.astype(jnp.float32).T)
    b_row = jnp.zeros((1, _OUT_LANES), jnp.float32).at[0, :n_out].set(
        fc_bias.astype(jnp.float32))

    vmem_est = _estimate_vmem_bytes(block_b, block_s, H, dtype.itemsize)
    vmem_limit = int(min(max(vmem_est * 5 // 4, 16 * 1024 * 1024), 100 * 1024 * 1024))

    kernel = functools.partial(_pool_fc_kernel, seq_tail=seq_tail)

    out = pl.pallas_call(
        kernel,
        out_shape=jax.ShapeDtypeStruct((B, 1, _OUT_LANES), jnp.float32),
        grid=grid,
        in_specs=[
            pl.BlockSpec((block_b, block_s, H), lambda b, s: (b, s, 0)),   # hidden states
            pl.BlockSpec((block_b, 1, block_s), lambda b, s: (b, 0, s)),   # attention mask
            pl.BlockSpec((H, _OUT_LANES), lambda b, s: (0, 0)),            # fc weight^T (padded)
            pl.BlockSpec((1, _OUT_LANES), lambda b, s: (0, 0)),            # fc bias (padded)
        ],
        out_specs=pl.BlockSpec((block_b, 1, _OUT_LANES), lambda b, s: (b, 0, 0)),
        scratch_shapes=[
            pltpu.VMEM((block_b, 1, H), jnp.float32),    # running sum(mask * h)
            pltpu.VMEM((block_b, 1, 1), jnp.float32),    # running sum(mask)
        ],
        compiler_params=pltpu.CompilerParams(
            dimension_semantics=("parallel", "arbitrary"),
            vmem_limit_bytes=vmem_limit),
    )(last_hidden_states, mask3, w_t, b_row)

    return out[:, 0, :n_out]


def _reference(last_hidden_states, attention_mask, fc_weight, fc_bias):
    mask_e = attention_mask.astype(jnp.float32)[:, :, None]
    pooled = (last_hidden_states * mask_e).sum(1) / jnp.maximum(mask_e.sum(1), 1e-9)
    return pooled @ fc_weight.T + fc_bias


if __name__ == "__main__":
    INITIALIZER_RANGE = 0.02  # config.initializer_range default
    key = jax.random.PRNGKey(0)
    k_hidden, k_w, k_hidden2, k_mask2 = jax.random.split(key, 4)

    # --- Test 1: small shapes consistent with the module (batch=2, seq=8, hidden=32). ---
    B, S, H = 2, 8, 32
    last_hidden_states = jax.random.normal(k_hidden, (B, S, H), dtype=jnp.float32)
    attention_mask = jnp.array(
        [[1, 1, 1, 1, 1, 1, 1, 1],
         [1, 1, 1, 1, 1, 0, 0, 0]], dtype=jnp.float32)
    fc_weight = INITIALIZER_RANGE * jax.random.normal(k_w, (6, H), dtype=jnp.float32)
    fc_bias = jnp.zeros((6,), dtype=jnp.float32)

    out = jax.block_until_ready(
        custom_model_forward(last_hidden_states, attention_mask, fc_weight, fc_bias))
    ref = _reference(last_hidden_states, attention_mask, fc_weight, fc_bias)
    assert out.shape == (B, 6)
    assert jnp.allclose(out, ref, atol=1e-4, rtol=1e-4)

    # --- Test 2: force multiple seq blocks + a ragged tail (S=200, block_s=128). ---
    B2, S2 = 2, 200
    h2 = jax.random.normal(k_hidden2, (B2, S2, H), dtype=jnp.float32)
    lens = jnp.array([200, 137])
    m2 = (jnp.arange(S2)[None, :] < lens[:, None]).astype(jnp.float32)
    out2 = jax.block_until_ready(
        custom_model_forward(h2, m2, fc_weight, fc_bias, block_override=(2, 128)))
    ref2 = _reference(h2, m2, fc_weight, fc_bias)
    assert out2.shape == (B2, 6)
    assert jnp.allclose(out2, ref2, atol=1e-4, rtol=1e-4)

    print("KERNEL_OK")
</pallas_src>

<mosaic_0001>
module attributes {stable_mosaic.version = 11 : i64} {
  func.func @_pool_fc_kernel(%arg0: i32, %arg1: i32, %arg2: memref<2x8x32xf32, #tpu.memory_space<vmem>>, %arg3: memref<2x1x8xf32, #tpu.memory_space<vmem>>, %arg4: memref<32x128xf32, #tpu.memory_space<vmem>>, %arg5: memref<1x128xf32, #tpu.memory_space<vmem>>, %arg6: memref<2x1x128xf32, #tpu.memory_space<vmem>>, %arg7: memref<2x1x32xf32, #tpu.memory_space<vmem>>, %arg8: memref<2x1x1xf32, #tpu.memory_space<vmem>>) attributes {dimension_semantics = [#tpu.dimension_semantics<parallel>, #tpu.dimension_semantics<arbitrary>], iteration_bounds = array<i64: 1, 1>, scalar_prefetch = 0 : i64, scratch_operands = 2 : i64, tpu.core_type = #tpu.core_type<tc>, window_params = [{transform_indices = @transform_0, window_bounds = array<i64: 2, 8, 32>}, {transform_indices = @transform_1, window_bounds = array<i64: 2, 1, 8>}, {pipeline_mode = #tpu.pipeline_mode<synchronous>, transform_indices = @transform_2, window_bounds = array<i64: 32, 128>}, {pipeline_mode = #tpu.pipeline_mode<synchronous>, transform_indices = @transform_3, window_bounds = array<i64: 1, 128>}, {transform_indices = @transform_4, window_bounds = array<i64: 2, 1, 128>}]} {
    %c0_i32 = arith.constant 0 : i32
    %0 = arith.cmpi eq, %arg1, %c0_i32 : i32
    %1 = arith.extui %0 : i1 to i32
    %c0_i32_0 = arith.constant 0 : i32
    %2 = arith.cmpi ne, %1, %c0_i32_0 : i32
    scf.if %2 {
      %cst_21 = arith.constant 0.000000e+00 : f32
      %17 = vector.broadcast %cst_21 : f32 to vector<2x1x32xf32>
      %c0_22 = arith.constant 0 : index
      %c0_23 = arith.constant 0 : index
      %c0_24 = arith.constant 0 : index
      %18 = vector.load %arg7[%c0_22, %c0_23, %c0_24] : memref<2x1x32xf32, #tpu.memory_space<vmem>>, vector<2x1x32xf32>
      tpu.vector_store %arg7[%c0_22, %c0_23, %c0_24], %17 {strides = array<i32>} : memref<2x1x32xf32, #tpu.memory_space<vmem>>, vector<2x1x32xf32>,
      %cst_25 = arith.constant 0.000000e+00 : f32
      %19 = vector.broadcast %cst_25 : f32 to vector<2x1x1xf32>
      %c0_26 = arith.constant 0 : index
      %c0_27 = arith.constant 0 : index
      %c0_28 = arith.constant 0 : index
      %20 = vector.load %arg8[%c0_26, %c0_27, %c0_28] : memref<2x1x1xf32, #tpu.memory_space<vmem>>, vector<2x1x1xf32>
      tpu.vector_store %arg8[%c0_26, %c0_27, %c0_28], %19 {strides = array<i32>} : memref<2x1x1xf32, #tpu.memory_space<vmem>>, vector<2x1x1xf32>,
    } else {
    }
    %c0 = arith.constant 0 : index
    %c0_1 = arith.constant 0 : index
    %c0_2 = arith.constant 0 : index
    %3 = vector.load %arg2[%c0, %c0_1, %c0_2] : memref<2x8x32xf32, #tpu.memory_space<vmem>>, vector<2x8x32xf32>
    %c0_3 = arith.constant 0 : index
    %c0_4 = arith.constant 0 : index
    %c0_5 = arith.constant 0 : index
    %4 = vector.load %arg3[%c0_3, %c0_4, %c0_5] : memref<2x1x8xf32, #tpu.memory_space<vmem>>, vector<2x1x8xf32>
    %c0_6 = arith.constant 0 : index
    %c0_7 = arith.constant 0 : index
    %c0_8 = arith.constant 0 : index
    %5 = vector.load %arg7[%c0_6, %c0_7, %c0_8] : memref<2x1x32xf32, #tpu.memory_space<vmem>>, vector<2x1x32xf32>
    "tpu.trace_start"() <{level = 10 : i32, message = "bqs,bsh->bqh"}> : () -> ()
    %cst = arith.constant dense<0.000000e+00> : vector<2x1x32xf32>
    %6 = tpu.matmul %4, %3, %cst {dimension_numbers = #tpu.dot_dimension_numbers<[2], [1], [1], [2], [0, 0, 0, 1, 1, 2], [0], [0]>} : vector<2x1x8xf32>, vector<2x8x32xf32>, vector<2x1x32xf32> -> vector<2x1x32xf32>
    "tpu.trace_stop"() : () -> ()
    %7 = arith.addf %5, %6 : vector<2x1x32xf32>
    %c0_9 = arith.constant 0 : index
    %c0_10 = arith.constant 0 : index
    %c0_11 = arith.constant 0 : index
    %8 = vector.load %arg7[%c0_9, %c0_10, %c0_11] : memref<2x1x32xf32, #tpu.memory_space<vmem>>, vector<2x1x32xf32>
    tpu.vector_store %arg7[%c0_9, %c0_10, %c0_11], %7 {strides = array<i32>} : memref<2x1x32xf32, #tpu.memory_space<vmem>>, vector<2x1x32xf32>,
    %c0_12 = arith.constant 0 : index
    %c0_13 = arith.constant 0 : index
    %c0_14 = arith.constant 0 : index
    %9 = vector.load %arg8[%c0_12, %c0_13, %c0_14] : memref<2x1x1xf32, #tpu.memory_space<vmem>>, vector<2x1x1xf32>
    %cst_15 = arith.constant dense<0.000000e+00> : vector<2x1xf32>
    %10 = vector.multi_reduction <add>, %4, %cst_15 [2] : vector<2x1x8xf32> to vector<2x1xf32>
    %11 = vector.shape_cast %10 : vector<2x1xf32> to vector<2x1x1xf32>
    %12 = arith.addf %9, %11 : vector<2x1x1xf32>
    %c0_16 = arith.constant 0 : index
    %c0_17 = arith.constant 0 : index
    %c0_18 = arith.constant 0 : index
    %13 = vector.load %arg8[%c0_16, %c0_17, %c0_18] : memref<2x1x1xf32, #tpu.memory_space<vmem>>, vector<2x1x1xf32>
    tpu.vector_store %arg8[%c0_16, %c0_17, %c0_18], %12 {strides = array<i32>} : memref<2x1x1xf32, #tpu.memory_space<vmem>>, vector<2x1x1xf32>,
    %c0_i32_19 = arith.constant 0 : i32
    %14 = arith.cmpi eq, %arg1, %c0_i32_19 : i32
    %15 = arith.extui %14 : i1 to i32
    %c0_i32_20 = arith.constant 0 : i32
    %16 = arith.cmpi ne, %15, %c0_i32_20 : i32
    scf.if %16 {
      %c0_21 = arith.constant 0 : index
      %c0_22 = arith.constant 0 : index
      %17 = vector.load %arg5[%c0_21, %c0_22] : memref<1x128xf32, #tpu.memory_space<vmem>>, vector<1x128xf32>
      %c0_23 = arith.constant 0 : index
      %c0_24 = arith.constant 0 : index
      %c0_25 = arith.constant 0 : index
      %18 = vector.load %arg8[%c0_23, %c0_24, %c0_25] : memref<2x1x1xf32, #tpu.memory_space<vmem>>, vector<1x1x1xf32>
      %19 = vector.shape_cast %18 : vector<1x1x1xf32> to vector<1x1xf32>
      %cst_26 = arith.constant 9.99999971E-10 : f32
      %20 = vector.broadcast %cst_26 : f32 to vector<1x1xf32>
      %21 = arith.maximumf %19, %20 : vector<1x1xf32>
      %c0_27 = arith.constant 0 : index
      %c0_28 = arith.constant 0 : index
      %c0_29 = arith.constant 0 : index
      %22 = vector.load %arg7[%c0_27, %c0_28, %c0_29] : memref<2x1x32xf32, #tpu.memory_space<vmem>>, vector<1x1x32xf32>
      %23 = vector.shape_cast %22 : vector<1x1x32xf32> to vector<1x32xf32>
      %24 = vector.broadcast %21 : vector<1x1xf32> to vector<1x32xf32>
      %25 = arith.divf %23, %24 : vector<1x32xf32>
      %c0_30 = arith.constant 0 : index
      %c0_31 = arith.constant 0 : index
      %26 = vector.load %arg4[%c0_30, %c0_31] : memref<32x128xf32, #tpu.memory_space<vmem>>, vector<32x128xf32>
      %cst_32 = arith.constant dense<0.000000e+00> : vector<1x128xf32>
      %27 = tpu.matmul %25, %26, %cst_32 {dimension_numbers = #tpu.dot_dimension_numbers<[1], [0], [0], [1], [0, 0, 1, 1], [], []>} : vector<1x32xf32>, vector<32x128xf32>, vector<1x128xf32> -> vector<1x128xf32>
      %28 = arith.addf %27, %17 : vector<1x128xf32>
      %c0_33 = arith.constant 0 : index
      %c0_34 = arith.constant 0 : index
      %c0_35 = arith.constant 0 : index
      %29 = vector.load %arg6[%c0_33, %c0_34, %c0_35] : memref<2x1x128xf32, #tpu.memory_space<vmem>>, vector<1x1x128xf32>
      %30 = vector.shape_cast %29 : vector<1x1x128xf32> to vector<1x128xf32>
      %31 = vector.shape_cast %28 : vector<1x128xf32> to vector<1x1x128xf32>
      tpu.vector_store %arg6[%c0_33, %c0_34, %c0_35], %31 {strides = array<i32>} : memref<2x1x128xf32, #tpu.memory_space<vmem>>, vector<1x1x128xf32>,
      %c1 = arith.constant 1 : index
      %c0_36 = arith.constant 0 : index
      %c0_37 = arith.constant 0 : index
      %32 = vector.load %arg8[%c1, %c0_36, %c0_37] : memref<2x1x1xf32, #tpu.memory_space<vmem>>, vector<1x1x1xf32>
      %33 = vector.shape_cast %32 : vector<1x1x1xf32> to vector<1x1xf32>
      %cst_38 = arith.constant 9.99999971E-10 : f32
      %34 = vector.broadcast %cst_38 : f32 to vector<1x1xf32>
      %35 = arith.maximumf %33, %34 : vector<1x1xf32>
      %c1_39 = arith.constant 1 : index
      %c0_40 = arith.constant 0 : index
      %c0_41 = arith.constant 0 : index
      %36 = vector.load %arg7[%c1_39, %c0_40, %c0_41] : memref<2x1x32xf32, #tpu.memory_space<vmem>>, vector<1x1x32xf32>
      %37 = vector.shape_cast %36 : vector<1x1x32xf32> to vector<1x32xf32>
      %38 = vector.broadcast %35 : vector<1x1xf32> to vector<1x32xf32>
      %39 = arith.divf %37, %38 : vector<1x32xf32>
      %c0_42 = arith.constant 0 : index
      %c0_43 = arith.constant 0 : index
      %40 = vector.load %arg4[%c0_42, %c0_43] : memref<32x128xf32, #tpu.memory_space<vmem>>, vector<32x128xf32>
      %cst_44 = arith.constant dense<0.000000e+00> : vector<1x128xf32>
      %41 = tpu.matmul %39, %40, %cst_44 {dimension_numbers = #tpu.dot_dimension_numbers<[1], [0], [0], [1], [0, 0, 1, 1], [], []>} : vector<1x32xf32>, vector<32x128xf32>, vector<1x128xf32> -> vector<1x128xf32>
      %42 = arith.addf %41, %17 : vector<1x128xf32>
      %c1_45 = arith.constant 1 : index
      %c0_46 = arith.constant 0 : index
      %c0_47 = arith.constant 0 : index
      %43 = vector.load %arg6[%c1_45, %c0_46, %c0_47] : memref<2x1x128xf32, #tpu.memory_space<vmem>>, vector<1x1x128xf32>
      %44 = vector.shape_cast %43 : vector<1x1x128xf32> to vector<1x128xf32>
      %45 = vector.shape_cast %42 : vector<1x128xf32> to vector<1x1x128xf32>
      tpu.vector_store %arg6[%c1_45, %c0_46, %c0_47], %45 {strides = array<i32>} : memref<2x1x128xf32, #tpu.memory_space<vmem>>, vector<1x1x128xf32>,
    } else {
    }
    return
  }
  func.func @transform_0(%arg0: i32, %arg1: i32) -> (i32, i32, i32) {
    %c0_i32 = arith.constant 0 : i32
    %c0_i32_0 = arith.constant 0 : i32
    return %arg0, %arg1, %c0_i32 : i32, i32, i32
  }
  func.func @transform_1(%arg0: i32, %arg1: i32) -> (i32, i32, i32) {
    %c0_i32 = arith.constant 0 : i32
    %c0_i32_0 = arith.constant 0 : i32
    return %arg0, %c0_i32, %arg1 : i32, i32, i32
  }
  func.func @transform_2(%arg0: i32, %arg1: i32) -> (i32, i32) {
    %c0_i32 = arith.constant 0 : i32
    %c0_i32_0 = arith.constant 0 : i32
    %c0_i32_1 = arith.constant 0 : i32
    return %c0_i32, %c0_i32_0 : i32, i32
  }
  func.func @transform_3(%arg0: i32, %arg1: i32) -> (i32, i32) {
    %c0_i32 = arith.constant 0 : i32
    %c0_i32_0 = arith.constant 0 : i32
    %c0_i32_1 = arith.constant 0 : i32
    return %c0_i32, %c0_i32_0 : i32, i32
  }
  func.func @transform_4(%arg0: i32, %arg1: i32) -> (i32, i32, i32) {
    %c0_i32 = arith.constant 0 : i32
    %c0_i32_0 = arith.constant 0 : i32
    %c0_i32_1 = arith.constant 0 : i32
    return %arg0, %c0_i32, %c0_i32_0 : i32, i32, i32
  }
}

</mosaic_0001>

<llo_original>
// kernel: tpu_custom_call.1
$region0: #{tpu_custom_call.1}
  #allocation0 [shape = 'u32[]', space=smem, size = 0x4, offset = 0x4, fixed_abs, tag = 'smem constant byte address 0x4 - core index']
  #allocation1 [shape = 'u32[144,128]{1,0:T(1,128)}', space=vmem, size = 0x12000, scoped, tag = 'internal scratch']
  #allocation2 [shape = 'f32[2,1,32]{2,1,0:T(1,128)}', space=vmem, size = 0x400, scoped, tag = 'scratch operand']
  #allocation3 [shape = 'f32[2,1,1]{2,1,0:T(1,128)}', space=vmem, size = 0x400, scoped, tag = 'scratch operand']
  %s0 = inlined_call_operand.hbm [shape: f32[2,8,32], index: 0, kind: input, shape index: {}]
  %s1 = inlined_call_operand.vmem [shape: f32[2,1,8], index: 1, kind: input, shape index: {}]
  %s2 = inlined_call_operand.hbm [shape: f32[32,128], index: 2, kind: input, shape index: {}]
  %s3 = inlined_call_operand.vmem [shape: f32[1,128], index: 3, kind: input, shape index: {}]
  %s4 = inlined_call_operand.hbm [shape: f32[2,1,128], index: 4, kind: output, shape index: {}]
  %s5 = sld [smem:[#allocation0]]
  $region42: #{tpu_custom_call.1} parent=0
    _
  %s7 = ssub.s32 1, %s5
  %s8 = scalar_select 0, %s7, %s5
  $region1: #{tpu_custom_call.1} parent=0
    #allocation4 [shape = 'u8[8192]{0}', space=vmem, size = 0x2000, scoped, tag = 'input window, operand 0, single buffered']
    #allocation5 [shape = 's32[1]{0}', space=sflag, size = 0x4, scoped, tag = 'scoped memory for tpu_custom_call.1']
    #allocation6 [shape = 's32[1]{0}', space=sflag, size = 0x4, scoped, tag = 'scoped memory for tpu_custom_call.1']
    #allocation7 [shape = 'u8[16384]{0}', space=vmem, size = 0x4000, scoped, tag = 'input window, operand 2, single buffered']
    #allocation8 [shape = 's32[1]{0}', space=sflag, size = 0x4, scoped, tag = 'scoped memory for tpu_custom_call.1']
    #allocation9 [shape = 'u8[1024]{0}', space=vmem, size = 0x400, scoped, tag = 'output window, operand 0, single buffered']
    %9 = vsyncpa [#allocation5], 0
    %10 = vsyncpa [#allocation8], 0
    %11 = vsyncpa [#allocation6], 0
    // Predicated region
    $region2: #{tpu_custom_call.1} parent=1 // pred_check
      _
    $region3: #{tpu_custom_call.1} parent=1 // pred_check_branch
      %13 = sbr.rel (0) target = $region5
    $region4: #{tpu_custom_call.1} parent=1 // pred_region
      %s15 = ssub.s32 256, 256
      %16 = vsyncadd [#allocation5], %s15
      %s17 = sshll.u32 [#allocation4], 4
      %s18 = int_to_ptr.vmem [resolvable:$true] %s17
      %23 = dma.hbm_to_vmem [thread:$0]  %s0, 256, %s18, [#allocation5], 128, 128, 8
    $region5: #{tpu_custom_call.1} parent=1 // pred_fallthru
      _
    // Predicated region
    $region6: #{tpu_custom_call.1} parent=1 // pred_check
      _
    $region7: #{tpu_custom_call.1} parent=1 // pred_check_branch
      %25 = sbr.rel (0) target = $region9
    $region8: #{tpu_custom_call.1} parent=1 // pred_region
      _
    $region9: #{tpu_custom_call.1} parent=1 // pred_fallthru
      _
    // Predicated region
    $region10: #{tpu_custom_call.1} parent=1 // pred_check
      _
    $region11: #{tpu_custom_call.1} parent=1 // pred_check_branch
      %27 = sbr.rel (0) target = $region13
    $region12: #{tpu_custom_call.1} parent=1 // pred_region
      %s29 = ssub.s32 512, 512
      %30 = vsyncadd [#allocation8], %s29
      %s31 = sshll.u32 [#allocation7], 4
      %s32 = int_to_ptr.vmem [resolvable:$true] %s31
      %37 = dma.hbm_to_vmem [thread:$0]  %s2, 512, %s32, [#allocation8], 128, 128, 8
    $region13: #{tpu_custom_call.1} parent=1 // pred_fallthru
      _
    // Predicated region
    $region14: #{tpu_custom_call.1} parent=1 // pred_check
      _
    $region15: #{tpu_custom_call.1} parent=1 // pred_check_branch
      %39 = sbr.rel (0) target = $region17
    $region16: #{tpu_custom_call.1} parent=1 // pred_region
      _
    $region17: #{tpu_custom_call.1} parent=1 // pred_fallthru
      _
    // Predicated region
    $region18: #{tpu_custom_call.1} parent=1 // pred_check
      _
    $region19: #{tpu_custom_call.1} parent=1 // pred_check_branch
      %41 = sbr.rel (0) target = $region21
    $region20: #{tpu_custom_call.1} parent=1 // pred_region
      %42 = dma.done [#allocation5], 256
    $region21: #{tpu_custom_call.1} parent=1 // pred_fallthru
      _
    // Predicated region
    $region22: #{tpu_custom_call.1} parent=1 // pred_check
      _
    $region23: #{tpu_custom_call.1} parent=1 // pred_check_branch
      %44 = sbr.rel (0) target = $region25
    $region24: #{tpu_custom_call.1} parent=1 // pred_region
      %45 = dma.done [#allocation8], 512
    $region25: #{tpu_custom_call.1} parent=1 // pred_fallthru
      _
    %p46 = scmp.eq.s32.totalorder 0, 0
    // Predicated region
    $region26: #{tpu_custom_call.1} parent=1 // pred_check
      %p47 = pneg %p46
    $region27: #{tpu_custom_call.1} parent=1 // pred_check_branch
      %49 = sbr.rel (%p47) target = $region29
    $region28: #{tpu_custom_call.1} parent=1 // pred_region
      %vm50 = vcmask 253952
      %51 = vst.msk [vmem:[#allocation2] sm:$0x1] %vm50, 0.0
      %52 = vst.msk [vmem:[#allocation2 + $0x1] sm:$0x1] %vm50, 0.0
      %vm53 = vcmask 0
      %54 = vst.msk [vmem:[#allocation3] sm:$0x1] %vm53, 0.0
      %55 = vst.msk [vmem:[#allocation3 + $0x1] sm:$0x1] %vm53, 0.0
    $region29: #{tpu_custom_call.1} parent=1 // pred_fallthru
      _
    %v56 = vld [vmem:[#allocation4] sm:$0xff]
    %v57 = vld [vmem:[#allocation4 + $0x8] sm:$0xff]
    %v58 = vld [vmem:[%s1] sm:$0x1]
    %v59 = vld [vmem:[%s1 + $0x1] sm:$0x1]
    %v60 = vld [vmem:[#allocation2] sm:$0x1]
    %v61 = vld [vmem:[#allocation2 + $0x1] sm:$0x1]
    %vm62 = vcmask 64512
    %v64 = vsel %vm62, %v58, 0
    %66 = vmatprep.subr.mxu0 0.0
    %67 = vmatpush1.msra.mxu0 %v56
    %68 = vmatprep.subr.mxu0 0.0
    %69 = vmatpush1.msra.mxu0 0.0
    %70 = vmatprep.subr.mxu0 0.0
    %71 = vmatpush1.msra.mxu0 0.0
    %72 = vmatprep.subr.mxu0 0.0
    %73 = vmatpush1.msra.mxu0 0.0
    %74 = vmatprep.subr.mxu0 0.0
    %75 = vmatpush1.msra.mxu0 0.0
    %76 = vmatprep.subr.mxu0 0.0
    %77 = vmatpush1.msra.mxu0 0.0
    %78 = vmatprep.subr.mxu0 0.0
    %79 = vmatpush1.msra.mxu0 0.0
    %80 = vmatprep.subr.mxu0 0.0
    %81 = vmatpush1.msra.mxu0 0.0
    %82 = vmatprep.subr.mxu0 0.0
    %83 = vmatpush1.msra.mxu0 0.0
    %84 = vmatprep.subr.mxu0 0.0
    %85 = vmatpush1.msra.mxu0 0.0
    %86 = vmatprep.subr.mxu0 0.0
    %87 = vmatpush1.msra.mxu0 0.0
    %88 = vmatprep.subr.mxu0 0.0
    %89 = vmatpush1.msra.mxu0 0.0
    %90 = vmatprep.subr.mxu0 0.0
    %91 = vmatpush1.msra.mxu0 0.0
    %92 = vmatprep.subr.mxu0 0.0
    %93 = vmatpush1.msra.mxu0 0.0
    %94 = vmatprep.subr.mxu0 0.0
    %95 = vmatpush1.msra.mxu0 0.0
    %96 = vmatprep.subr.mxu0 0.0
    %97 = vmatpush1.msra.mxu0 0.0
    %98 = vmatprep.subr.mxu0 0.0
    %99 = vmatpush1.msra.mxu0 0.0
    %100 = vmatprep.subr.mxu0 0.0
    %101 = vmatpush1.msra.mxu0 0.0
    %102 = vmatprep.subr.mxu0 0.0
    %103 = vmatpush1.msra.mxu0 0.0
    %104 = vmatprep.subr.mxu0 0.0
    %105 = vmatpush1.msra.mxu0 0.0
    %106 = vmatprep.subr.mxu0 0.0
    %107 = vmatpush1.msra.mxu0 0.0
    %108 = vmatprep.subr.mxu0 0.0
    %109 = vmatpush1.msra.mxu0 0.0
    %110 = vmatprep.subr.mxu0 0.0
    %111 = vmatpush1.msra.mxu0 0.0
    %112 = vmatprep.subr.mxu0 0.0
    %113 = vmatpush1.msra.mxu0 0.0
    %114 = vmatprep.subr.mxu0 0.0
    %115 = vmatpush1.msra.mxu0 0.0
    %116 = vmatprep.subr.mxu0 0.0
    %117 = vmatpush1.msra.mxu0 0.0
    %118 = vmatprep.subr.mxu0 0.0
    %119 = vmatpush1.msra.mxu0 0.0
    %120 = vmatprep.subr.mxu0 0.0
    %121 = vmatpush1.msra.mxu0 0.0
    %122 = vmatprep.subr.mxu0 0.0
    %123 = vmatpush1.msra.mxu0 0.0
    %124 = vmatprep.subr.mxu0 0.0
    %125 = vmatpush1.msra.mxu0 0.0
    %126 = vmatprep.subr.mxu0 0.0
    %127 = vmatpush1.msra.mxu0 0.0
    %128 = vmatprep.subr.mxu0 0.0
    %129 = vmatpush1.msra.mxu0 0.0
    %130 = vmatprep.mubr.f32.mxu0 0.0
    %131 = vmatmul.mubr.f32.gmra.mrb[0].mxu0 %v64
    %v132 = vpop.f32.mrb[0].mxu0
    %v133 = vadd.f32 0.0, %v132
    %v134 = vpop.f32.mrb[0].mxu0
    %135 = vdwg.mxu0
    %v137 = vsel %vm62, %v59, 0
    %139 = vmatprep.subr.mxu0 0.0
    %140 = vmatpush1.msra.mxu0 %v57
    %141 = vmatprep.subr.mxu0 0.0
    %142 = vmatpush1.msra.mxu0 0.0
    %143 = vmatprep.subr.mxu0 0.0
    %144 = vmatpush1.msra.mxu0 0.0
    %145 = vmatprep.subr.mxu0 0.0
    %146 = vmatpush1.msra.mxu0 0.0
    %147 = vmatprep.subr.mxu0 0.0
    %148 = vmatpush1.msra.mxu0 0.0
    %149 = vmatprep.subr.mxu0 0.0
    %150 = vmatpush1.msra.mxu0 0.0
    %151 = vmatprep.subr.mxu0 0.0
    %152 = vmatpush1.msra.mxu0 0.0
    %153 = vmatprep.subr.mxu0 0.0
    %154 = vmatpush1.msra.mxu0 0.0
    %155 = vmatprep.subr.mxu0 0.0
    %156 = vmatpush1.msra.mxu0 0.0
    %157 = vmatprep.subr.mxu0 0.0
    %158 = vmatpush1.msra.mxu0 0.0
    %159 = vmatprep.subr.mxu0 0.0
    %160 = vmatpush1.msra.mxu0 0.0
    %161 = vmatprep.subr.mxu0 0.0
    %162 = vmatpush1.msra.mxu0 0.0
    %163 = vmatprep.subr.mxu0 0.0
    %164 = vmatpush1.msra.mxu0 0.0
    %165 = vmatprep.subr.mxu0 0.0
    %166 = vmatpush1.msra.mxu0 0.0
    %167 = vmatprep.subr.mxu0 0.0
    %168 = vmatpush1.msra.mxu0 0.0
    %169 = vmatprep.subr.mxu0 0.0
    %170 = vmatpush1.msra.mxu0 0.0
    %171 = vmatprep.subr.mxu0 0.0
    %172 = vmatpush1.msra.mxu0 0.0
    %173 = vmatprep.subr.mxu0 0.0
    %174 = vmatpush1.msra.mxu0 0.0
    %175 = vmatprep.subr.mxu0 0.0
    %176 = vmatpush1.msra.mxu0 0.0
    %177 = vmatprep.subr.mxu0 0.0
    %178 = vmatpush1.msra.mxu0 0.0
    %179 = vmatprep.subr.mxu0 0.0
    %180 = vmatpush1.msra.mxu0 0.0
    %181 = vmatprep.subr.mxu0 0.0
    %182 = vmatpush1.msra.mxu0 0.0
    %183 = vmatprep.subr.mxu0 0.0
    %184 = vmatpush1.msra.mxu0 0.0
    %185 = vmatprep.subr.mxu0 0.0
    %186 = vmatpush1.msra.mxu0 0.0
    %187 = vmatprep.subr.mxu0 0.0
    %188 = vmatpush1.msra.mxu0 0.0
    %189 = vmatprep.subr.mxu0 0.0
    %190 = vmatpush1.msra.mxu0 0.0
    %191 = vmatprep.subr.mxu0 0.0
    %192 = vmatpush1.msra.mxu0 0.0
    %193 = vmatprep.subr.mxu0 0.0
    %194 = vmatpush1.msra.mxu0 0.0
    %195 = vmatprep.subr.mxu0 0.0
    %196 = vmatpush1.msra.mxu0 0.0
    %197 = vmatprep.subr.mxu0 0.0
    %198 = vmatpush1.msra.mxu0 0.0
    %199 = vmatprep.subr.mxu0 0.0
    %200 = vmatpush1.msra.mxu0 0.0
    %201 = vmatprep.subr.mxu0 0.0
    %202 = vmatpush1.msra.mxu0 0.0
    %203 = vmatprep.mubr.f32.mxu0 0.0
    %204 = vmatmul.mubr.f32.gmra.mrb[0].mxu0 %v137
    %v205 = vpop.f32.mrb[0].mxu0
    %v206 = vadd.f32 0.0, %v205
    %v207 = vpop.f32.mrb[0].mxu0
    %208 = vdwg.mxu0
    %v209 = vadd.f32 %v60, %v133
    %v210 = vadd.f32 %v61, %v206
    %vm211 = vcmask 253952
    %212 = vst.msk [vmem:[#allocation2] sm:$0x1] %vm211, %v209
    %213 = vst.msk [vmem:[#allocation2 + $0x1] sm:$0x1] %vm211, %v210
    %v214 = vld [vmem:[#allocation3] sm:$0x1]
    %v215 = vld [vmem:[#allocation3 + $0x1] sm:$0x1]
    %vm216 = vcmask 57344
    %v217 = vsel %vm216, %v58, 0.0
    %218 = vadd.xlane.f32.xlu0 %v217
    %v219 = vpop.xlane.xlu0 %218
    %v220 = vsel %vm216, %v59, 0.0
    %221 = vadd.xlane.f32.xlu0 %v220
    %v222 = vpop.xlane.xlu0 %221
    %v223 = vadd.f32 %v214, %v219
    %v224 = vadd.f32 %v215, %v222
    %vm225 = vcmask 0
    %226 = vst.msk [vmem:[#allocation3] sm:$0x1] %vm225, %v223
    %227 = vst.msk [vmem:[#allocation3 + $0x1] sm:$0x1] %vm225, %v224
    // Predicated region
    $region30: #{tpu_custom_call.1} parent=1 // pred_check
      %p228 = pneg %p46
    $region31: #{tpu_custom_call.1} parent=1 // pred_check_branch
      %230 = sbr.rel (%p228) target = $region33
    $region32: #{tpu_custom_call.1} parent=1 // pred_region
      %v231 = vld [vmem:[%s3] sm:$0x1]
      %v232 = vld [vmem:[#allocation3] sm:$0x1]
      %v233 = vmax.f32 %v232, 1e-09
      %v234 = vld [vmem:[#allocation2] sm:$0x1]
      %236 = vset.pattern.permute.xlu0 0
      %237 = vperm.xlu0 %236, %v233
      %v238 = vpop.permute.xlu0 %237
      %v240 = vlaneseq
      %v241 = vshrl.u32 %v240, 7
      %v242 = vsub.s32 0, %v241
      %v243 = vrot.slane %v238, %v242
      %v244 = vrcp.pop %v243
      %v245 = vmul.f32 %v234, %v244
      %v246 = vld [vmem:[#allocation7] sm:$0xff]
      %v247 = vld [vmem:[#allocation7 + $0x8] sm:$0xff]
      %v248 = vld [vmem:[#allocation7 + $0x10] sm:$0xff]
      %v249 = vld [vmem:[#allocation7 + $0x18] sm:$0xff]
      %vm250 = vcmask 261120
      %v252 = vsel %vm250, %v245, 0
      %254 = vmatprep.subr.mxu0 0.0
      %255 = vmatpush1.msra.mxu0 %v246
      %256 = vmatprep.subr.mxu0 0.0
      %257 = vmatpush1.msra.mxu0 %v247
      %258 = vmatprep.subr.mxu0 0.0
      %259 = vmatpush1.msra.mxu0 %v248
      %260 = vmatprep.subr.mxu0 0.0
      %261 = vmatpush1.msra.mxu0 %v249
      %262 = vmatprep.subr.mxu0 0.0
      %263 = vmatpush1.msra.mxu0 0.0
      %264 = vmatprep.subr.mxu0 0.0
      %265 = vmatpush1.msra.mxu0 0.0
      %266 = vmatprep.subr.mxu0 0.0
      %267 = vmatpush1.msra.mxu0 0.0
      %268 = vmatprep.subr.mxu0 0.0
      %269 = vmatpush1.msra.mxu0 0.0
      %270 = vmatprep.subr.mxu0 0.0
      %271 = vmatpush1.msra.mxu0 0.0
      %272 = vmatprep.subr.mxu0 0.0
      %273 = vmatpush1.msra.mxu0 0.0
      %274 = vmatprep.subr.mxu0 0.0
      %275 = vmatpush1.msra.mxu0 0.0
      %276 = vmatprep.subr.mxu0 0.0
      %277 = vmatpush1.msra.mxu0 0.0
      %278 = vmatprep.subr.mxu0 0.0
      %279 = vmatpush1.msra.mxu0 0.0
      %280 = vmatprep.subr.mxu0 0.0
      %281 = vmatpush1.msra.mxu0 0.0
      %282 = vmatprep.subr.mxu0 0.0
      %283 = vmatpush1.msra.mxu0 0.0
      %284 = vmatprep.subr.mxu0 0.0
      %285 = vmatpush1.msra.mxu0 0.0
      %286 = vmatprep.subr.mxu0 0.0
      %287 = vmatpush1.msra.mxu0 0.0
      %288 = vmatprep.subr.mxu0 0.0
      %289 = vmatpush1.msra.mxu0 0.0
      %290 = vmatprep.subr.mxu0 0.0
      %291 = vmatpush1.msra.mxu0 0.0
      %292 = vmatprep.subr.mxu0 0.0
      %293 = vmatpush1.msra.mxu0 0.0
      %294 = vmatprep.subr.mxu0 0.0
      %295 = vmatpush1.msra.mxu0 0.0
      %296 = vmatprep.subr.mxu0 0.0
      %297 = vmatpush1.msra.mxu0 0.0
      %298 = vmatprep.subr.mxu0 0.0
      %299 = vmatpush1.msra.mxu0 0.0
      %300 = vmatprep.subr.mxu0 0.0
      %301 = vmatpush1.msra.mxu0 0.0
      %302 = vmatprep.subr.mxu0 0.0
      %303 = vmatpush1.msra.mxu0 0.0
      %304 = vmatprep.subr.mxu0 0.0
      %305 = vmatpush1.msra.mxu0 0.0
      %306 = vmatprep.subr.mxu0 0.0
      %307 = vmatpush1.msra.mxu0 0.0
      %308 = vmatprep.subr.mxu0 0.0
      %309 = vmatpush1.msra.mxu0 0.0
      %310 = vmatprep.subr.mxu0 0.0
      %311 = vmatpush1.msra.mxu0 0.0
      %312 = vmatprep.subr.mxu0 0.0
      %313 = vmatpush1.msra.mxu0 0.0
      %314 = vmatprep.subr.mxu0 0.0
      %315 = vmatpush1.msra.mxu0 0.0
      %316 = vmatprep.subr.mxu0 0.0
      %317 = vmatpush1.msra.mxu0 0.0
      %318 = vmatprep.mubr.f32.mxu0 0.0
      %319 = vmatmul.mubr.f32.gmra.mrb[0].mxu0 %v252
      %v320 = vpop.f32.mrb[0].mxu0
      %v321 = vadd.f32 %v231, %v320
      %v322 = vpop.f32.mrb[0].mxu0
      %323 = vdwg.mxu0
      %324 = vst [vmem:[#allocation9] sm:$0x1] %v321
      %s325 = scalar_lea.vmem [#allocation3], 1
      %v326 = vld [vmem:[%s325] sm:$0x1]
      %v327 = vmax.f32 %v326, 1e-09
      %s328 = scalar_lea.vmem [#allocation2], 1
      %v329 = vld [vmem:[%s328] sm:$0x1]
      %331 = vset.pattern.permute.xlu0 0
      %332 = vperm.xlu0 %331, %v327
      %v333 = vpop.permute.xlu0 %332
      %v335 = vlaneseq
      %v336 = vshrl.u32 %v335, 7
      %v337 = vsub.s32 0, %v336
      %v338 = vrot.slane %v333, %v337
      %v339 = vrcp.pop %v338
      %v340 = vmul.f32 %v329, %v339
      %v341 = vld [vmem:[#allocation7] sm:$0xff]
      %v342 = vld [vmem:[#allocation7 + $0x8] sm:$0xff]
      %v343 = vld [vmem:[#allocation7 + $0x10] sm:$0xff]
      %v344 = vld [vmem:[#allocation7 + $0x18] sm:$0xff]
      %v346 = vsel %vm250, %v340, 0
      %348 = vmatprep.subr.mxu0 0.0
      %349 = vmatpush1.msra.mxu0 %v341
      %350 = vmatprep.subr.mxu0 0.0
      %351 = vmatpush1.msra.mxu0 %v342
      %352 = vmatprep.subr.mxu0 0.0
      %353 = vmatpush1.msra.mxu0 %v343
      %354 = vmatprep.subr.mxu0 0.0
      %355 = vmatpush1.msra.mxu0 %v344
      %356 = vmatprep.subr.mxu0 0.0
      %357 = vmatpush1.msra.mxu0 0.0
      %358 = vmatprep.subr.mxu0 0.0
      %359 = vmatpush1.msra.mxu0 0.0
      %360 = vmatprep.subr.mxu0 0.0
      %361 = vmatpush1.msra.mxu0 0.0
      %362 = vmatprep.subr.mxu0 0.0
      %363 = vmatpush1.msra.mxu0 0.0
      %364 = vmatprep.subr.mxu0 0.0
      %365 = vmatpush1.msra.mxu0 0.0
      %366 = vmatprep.subr.mxu0 0.0
      %367 = vmatpush1.msra.mxu0 0.0
      %368 = vmatprep.subr.mxu0 0.0
      %369 = vmatpush1.msra.mxu0 0.0
      %370 = vmatprep.subr.mxu0 0.0
      %371 = vmatpush1.msra.mxu0 0.0
      %372 = vmatprep.subr.mxu0 0.0
      %373 = vmatpush1.msra.mxu0 0.0
      %374 = vmatprep.subr.mxu0 0.0
      %375 = vmatpush1.msra.mxu0 0.0
      %376 = vmatprep.subr.mxu0 0.0
      %377 = vmatpush1.msra.mxu0 0.0
      %378 = vmatprep.subr.mxu0 0.0
      %379 = vmatpush1.msra.mxu0 0.0
      %380 = vmatprep.subr.mxu0 0.0
      %381 = vmatpush1.msra.mxu0 0.0
      %382 = vmatprep.subr.mxu0 0.0
      %383 = vmatpush1.msra.mxu0 0.0
      %384 = vmatprep.subr.mxu0 0.0
      %385 = vmatpush1.msra.mxu0 0.0
      %386 = vmatprep.subr.mxu0 0.0
      %387 = vmatpush1.msra.mxu0 0.0
      %388 = vmatprep.subr.mxu0 0.0
      %389 = vmatpush1.msra.mxu0 0.0
      %390 = vmatprep.subr.mxu0 0.0
      %391 = vmatpush1.msra.mxu0 0.0
      %392 = vmatprep.subr.mxu0 0.0
      %393 = vmatpush1.msra.mxu0 0.0
      %394 = vmatprep.subr.mxu0 0.0
      %395 = vmatpush1.msra.mxu0 0.0
      %396 = vmatprep.subr.mxu0 0.0
      %397 = vmatpush1.msra.mxu0 0.0
      %398 = vmatprep.subr.mxu0 0.0
      %399 = vmatpush1.msra.mxu0 0.0
      %400 = vmatprep.subr.mxu0 0.0
      %401 = vmatpush1.msra.mxu0 0.0
      %402 = vmatprep.subr.mxu0 0.0
      %403 = vmatpush1.msra.mxu0 0.0
      %404 = vmatprep.subr.mxu0 0.0
      %405 = vmatpush1.msra.mxu0 0.0
      %406 = vmatprep.subr.mxu0 0.0
      %407 = vmatpush1.msra.mxu0 0.0
      %408 = vmatprep.subr.mxu0 0.0
      %409 = vmatpush1.msra.mxu0 0.0
      %410 = vmatprep.subr.mxu0 0.0
      %411 = vmatpush1.msra.mxu0 0.0
      %412 = vmatprep.mubr.f32.mxu0 0.0
      %413 = vmatmul.mubr.f32.gmra.mrb[0].mxu0 %v346
      %v414 = vpop.f32.mrb[0].mxu0
      %v415 = vadd.f32 %v231, %v414
      %v416 = vpop.f32.mrb[0].mxu0
      %417 = vdwg.mxu0
      %s418 = scalar_lea.vmem [#allocation9], 1
      %419 = vst [vmem:[%s418] sm:$0x1] %v415
    $region33: #{tpu_custom_call.1} parent=1 // pred_fallthru
      _
    // Predicated region
    $region34: #{tpu_custom_call.1} parent=1 // pred_check
      _
    $region35: #{tpu_custom_call.1} parent=1 // pred_check_branch
      %421 = sbr.rel (0) target = $region37
    $region36: #{tpu_custom_call.1} parent=1 // pred_region
      %s423 = ssub.s32 32, 32
      %424 = vsyncadd [#allocation6], %s423
      %s425 = sshll.u32 [#allocation9], 4
      %s426 = int_to_ptr.vmem [resolvable:$true] %s425
      %431 = dma.vmem_to_hbm [thread:$0]  %s426, 32, %s4, [#allocation6], 16, 16, 1
    $region37: #{tpu_custom_call.1} parent=1 // pred_fallthru
      _
    // Predicated region
    $region38: #{tpu_custom_call.1} parent=1 // pred_check
      _
    $region39: #{tpu_custom_call.1} parent=1 // pred_check_branch
      %433 = sbr.rel (0) target = $region41
    $region40: #{tpu_custom_call.1} parent=1 // pred_region
      %434 = dma.done [#allocation6], 32
    $region41: #{tpu_custom_call.1} parent=1 // pred_fallthru
      _
    %435 = vsyncpa [#allocation5], 1
    %436 = vsyncpa [#allocation8], 1
    %437 = vsyncpa [#allocation6], 1

</llo_original>
